<compile_context>
chip_gen: v7x
topology: tpu7x:2x2x1
jax: 0.10.0
libtpu: 0.0.40
codegen_flags: <defaults>
</compile_context>

<pallas_src>
import functools
import math

import jax
import jax.numpy as jnp
from jax import lax
from jax.experimental import pallas as pl
from jax.experimental.pallas import tpu as pltpu


# ----------------------------------------------------------------------------
# Parameter setup (buffer `pe` from __init__) -- plain JAX glue.
# ----------------------------------------------------------------------------
def make_positional_encoding_table(max_len: int, d_model: int) -> jnp.ndarray:
    """Deterministic sin/cos table, identical to the PyTorch buffer (squeezed)."""
    position = jnp.arange(max_len, dtype=jnp.float32)[:, None]            # [L,1]
    div_term = jnp.exp(
        jnp.arange(0, d_model, 2, dtype=jnp.float32) * (-math.log(10000.0) / d_model)
    )                                                                     # [D/2]
    pe = jnp.zeros((max_len, d_model), dtype=jnp.float32)
    pe = pe.at[:, 0::2].set(jnp.sin(position * div_term))
    pe = pe.at[:, 1::2].set(jnp.cos(position * div_term))
    return pe                                                             # [L, D]


# ----------------------------------------------------------------------------
# Counter-based hash (lowbias32 mixer) -> uniform uint32 from element index.
# Plain VPU ops only, so it lowers on TPU and in interpret mode.
# ----------------------------------------------------------------------------
def _mix32(x, seed_u32):
    x = x ^ (seed_u32 * jnp.uint32(0x9E3779B9))
    x = x ^ (x >> 16)
    x = x * jnp.uint32(0x7FEB352D)
    x = x ^ (x >> 15)
    x = x * jnp.uint32(0x846CA68B)
    x = x ^ (x >> 16)
    return x


# ----------------------------------------------------------------------------
# Pallas kernel: chunked (x + pe) with optional inverted dropout.
#   x_ref/o_ref : (TS, B*D)    pe_ref : (TS, D)    seed_ref : SMEM (1,)
# ----------------------------------------------------------------------------
def _pos_enc_kernel(seed_ref, x_ref, pe_ref, o_ref, *,
                    batch, d_model, tile_s, p, training):
    pe_blk = pe_ref[...]                                  # (TS, D), native dtype

    use_dropout = training and p > 0.0
    if use_dropout:
        scale = jnp.asarray(1.0 / (1.0 - p), dtype=o_ref.dtype)
        # keep iff (bits >> 1) >= p * 2^31  ->  P(keep) = 1 - p
        thresh = jnp.int32(min(int(p * (1 << 31)), (1 << 31) - 1))
        seed_u = seed_ref[0].astype(jnp.uint32)
        row0 = pl.program_id(0) * tile_s
        rows = (lax.broadcasted_iota(jnp.int32, pe_blk.shape, 0) + row0).astype(jnp.uint32)
        cols = lax.broadcasted_iota(jnp.int32, pe_blk.shape, 1).astype(jnp.uint32)
        lane_stride = jnp.uint32(batch * d_model)

    # Static per-batch loop: pe tile is reused B times, no (TS, B*D) temporary,
    # and RNG bits are only ever live for one (TS, D) chunk at a time.
    for b in range(batch):
        off = b * d_model                                  # static -> aligned slice
        y = x_ref[:, pl.ds(off, d_model)] + pe_blk         # native-dtype add
        if use_dropout:
            lin = rows * lane_stride + cols + jnp.uint32(off)   # absolute element id
            bits = _mix32(lin, seed_u)
            keep = (bits >> 1).astype(jnp.int32) >= thresh
            y = jnp.where(keep, y * scale, jnp.zeros_like(y))
        o_ref[:, pl.ds(off, d_model)] = y.astype(o_ref.dtype)


# ----------------------------------------------------------------------------
# Tile sizing: ~2 MiB x/out blocks, >= ~8 grid steps, dtype-specific sublane
# rounding.  Small blocks keep double-buffering effective and leave plenty of
# headroom under the default scoped-VMEM limit on every generation (incl. v7x).
# ----------------------------------------------------------------------------
_TARGET_BLOCK_BYTES = 2 * 1024 * 1024
_MIN_GRID_STEPS = 8


def _choose_tile_s(S, B, D, itemsize):
    sub = {4: 8, 2: 16, 1: 32}.get(itemsize, 8)            # sublane multiple per dtype
    if S <= sub:
        return S                                           # full-extent block is legal
    row_bytes = B * D * itemsize
    tile_s = max(1, _TARGET_BLOCK_BYTES // max(row_bytes, 1))
    tile_s = min(tile_s, pl.cdiv(S, _MIN_GRID_STEPS))      # keep the grid >= ~8 steps
    tile_s = max(sub, (tile_s // sub) * sub)               # dtype-correct rounding
    return min(tile_s, S)


def positional_encoding(x, pe_table, *, p=0.1, training=False, seed=0, tile_s=None):
    """x: [S, B, D].  pe_table: [max_len, D].  Returns [S, B, D]."""
    S, B, D = x.shape
    assert pe_table.shape[0] >= S and pe_table.shape[1] == D

    itemsize = jnp.dtype(x.dtype).itemsize
    if tile_s is None:
        tile_s = _choose_tile_s(S, B, D, itemsize)
    tile_s = min(tile_s, S)

    x2 = x.reshape(S, B * D)                     # metadata-only reshape (row-major)
    pe2 = pe_table[:S].astype(x.dtype)           # [S, D], sublane-dense
    seed_arr = jnp.array([seed], dtype=jnp.int32)

    grid = (pl.cdiv(S, tile_s),)
    kernel = functools.partial(
        _pos_enc_kernel, batch=B, d_model=D, tile_s=tile_s,
        p=float(p), training=bool(training),
    )

    bytes_accessed = (2 * S * B * D + S * D) * itemsize     # read x + pe, write out
    cost = pl.CostEstimate(
        flops=2 * S * B * D, transcendentals=0, bytes_accessed=bytes_accessed
    )

    out2 = pl.pallas_call(
        kernel,
        out_shape=jax.ShapeDtypeStruct((S, B * D), x.dtype),
        grid_spec=pltpu.PrefetchScalarGridSpec(
            num_scalar_prefetch=1,               # seed lands in SMEM
            grid=grid,
            in_specs=[
                pl.BlockSpec((tile_s, B * D), lambda i, seed: (i, 0)),   # x
                pl.BlockSpec((tile_s, D), lambda i, seed: (i, 0)),       # pe
            ],
            out_specs=pl.BlockSpec((tile_s, B * D), lambda i, seed: (i, 0)),
        ),
        compiler_params=pltpu.CompilerParams(
            dimension_semantics=("parallel",),   # mask is index-based -> order free
        ),
        cost_estimate=cost,
        # Flat-arg index 1 (after the scalar-prefetch seed) is x2 -> alias to output,
        # avoiding a second S*B*D HBM buffer when callers donate x.
        input_output_aliases={1: 0},
    )(seed_arr, x2, pe2)

    return out2.reshape(S, B, D)


# ----------------------------------------------------------------------------
# Demo / self-check
# ----------------------------------------------------------------------------
if __name__ == "__main__":
    S, B, D = 8, 2, 32        # seq len, batch, embed dim
    MAX_LEN = 64
    P_DROP = 0.1

    key = jax.random.PRNGKey(0)
    x = jax.random.normal(key, (S, B, D), dtype=jnp.float32)
    pe_table = make_positional_encoding_table(MAX_LEN, D)

    ref = x + pe_table[:S][:, None, :]

    # Eval mode: dropout is identity -> deterministic, check against reference.
    out_eval = jax.block_until_ready(
        positional_encoding(x, pe_table, p=P_DROP, training=False)
    )
    assert out_eval.shape == (S, B, D)
    assert jnp.allclose(out_eval, ref, atol=1e-6), "eval-mode mismatch"

    # Train mode: every element must be either dropped (exact 0) or the
    # reference value scaled by 1/(1-p); drop fraction must be plausible.
    out_train = jax.block_until_ready(
        positional_encoding(x, pe_table, p=P_DROP, training=True, seed=123)
    )
    assert out_train.shape == (S, B, D)
    scaled = ref * jnp.float32(1.0 / (1.0 - P_DROP))
    dropped = out_train == 0.0
    ok = dropped | jnp.isclose(out_train, scaled, rtol=1e-4, atol=1e-5)
    assert bool(jnp.all(ok)), "train-mode dropout values mismatch"
    drop_frac = float(jnp.mean(dropped.astype(jnp.float32)))
    assert 0.0 < drop_frac < 0.4, f"implausible dropout fraction {drop_frac}"

    # TODO(synk): dropout mask comes from an in-kernel counter-based hash, so it
    # is not bit-identical to torch.nn.Dropout's RNG stream (eval path is exact).

    print("KERNEL_OK")
</pallas_src>

<mosaic_0001>
module attributes {stable_mosaic.version = 11 : i64} {
  func.func @_pos_enc_kernel(%arg0: i32, %arg1: memref<1xi32, #tpu.memory_space<smem>>, %arg2: memref<8x64xf32, #tpu.memory_space<vmem>>, %arg3: memref<8x32xf32, #tpu.memory_space<vmem>>, %arg4: memref<8x64xf32, #tpu.memory_space<vmem>>) attributes {dimension_semantics = [#tpu.dimension_semantics<parallel>], iteration_bounds = array<i64: 1>, scalar_prefetch = 1 : i64, scratch_operands = 0 : i64, tpu.core_type = #tpu.core_type<tc>, window_params = [{transform_indices = @transform_0, window_bounds = array<i64: 8, 64>}, {transform_indices = @transform_1, window_bounds = array<i64: 8, 32>}, {transform_indices = @transform_2, window_bounds = array<i64: 8, 64>}]} {
    %c0 = arith.constant 0 : index
    %c0_0 = arith.constant 0 : index
    %0 = vector.load %arg3[%c0, %c0_0] : memref<8x32xf32, #tpu.memory_space<vmem>>, vector<8x32xf32>
    %c0_1 = arith.constant 0 : index
    %c0_2 = arith.constant 0 : index
    %1 = vector.load %arg2[%c0_1, %c0_2] : memref<8x64xf32, #tpu.memory_space<vmem>>, vector<8x32xf32>
    %2 = arith.addf %1, %0 : vector<8x32xf32>
    %c0_3 = arith.constant 0 : index
    %c0_4 = arith.constant 0 : index
    %3 = vector.load %arg4[%c0_3, %c0_4] : memref<8x64xf32, #tpu.memory_space<vmem>>, vector<8x32xf32>
    tpu.vector_store %arg4[%c0_3, %c0_4], %2 {strides = array<i32>} : memref<8x64xf32, #tpu.memory_space<vmem>>, vector<8x32xf32>,
    %c0_5 = arith.constant 0 : index
    %c32 = arith.constant 32 : index
    %4 = vector.load %arg2[%c0_5, %c32] : memref<8x64xf32, #tpu.memory_space<vmem>>, vector<8x32xf32>
    %5 = arith.addf %4, %0 : vector<8x32xf32>
    %c0_6 = arith.constant 0 : index
    %c32_7 = arith.constant 32 : index
    %6 = vector.load %arg4[%c0_6, %c32_7] : memref<8x64xf32, #tpu.memory_space<vmem>>, vector<8x32xf32>
    tpu.vector_store %arg4[%c0_6, %c32_7], %5 {strides = array<i32>} : memref<8x64xf32, #tpu.memory_space<vmem>>, vector<8x32xf32>,
    return
  }
  func.func @transform_0(%arg0: i32, %arg1: memref<1xi32, #tpu.memory_space<smem>>) -> (i32, i32) {
    %c0_i32 = arith.constant 0 : i32
    %c0_i32_0 = arith.constant 0 : i32
    return %arg0, %c0_i32 : i32, i32
  }
  func.func @transform_1(%arg0: i32, %arg1: memref<1xi32, #tpu.memory_space<smem>>) -> (i32, i32) {
    %c0_i32 = arith.constant 0 : i32
    %c0_i32_0 = arith.constant 0 : i32
    return %arg0, %c0_i32 : i32, i32
  }
  func.func @transform_2(%arg0: i32, %arg1: memref<1xi32, #tpu.memory_space<smem>>) -> (i32, i32) {
    %c0_i32 = arith.constant 0 : i32
    %c0_i32_0 = arith.constant 0 : i32
    return %arg0, %c0_i32 : i32, i32
  }
}

</mosaic_0001>

<llo_original>
// kernel: tpu_custom_call.1
$region0: #{tpu_custom_call.1}
  #allocation0 [shape = 'u32[]', space=smem, size = 0x4, offset = 0x4, fixed_abs, tag = 'smem constant byte address 0x4 - core index']
  #allocation1 [shape = 'u32[144,128]{1,0:T(1,128)}', space=vmem, size = 0x12000, scoped, tag = 'internal scratch']
  #allocation2 [shape = 's32[1]{0}', space=sflag, size = 0x4, scoped, tag = 'scoped memory for tpu_custom_call.1']
  #allocation3 [shape = 's32[1]{0:T(128)S(6)}', space=smem, size = 0x200, scoped, tag = 'prefetched SMEM operand 0']
  %s0 = inlined_call_operand.<no memory space> [shape: s32[1], index: 0, kind: input, shape index: {}]
  %s1 = inlined_call_operand.hbm [shape: f32[8,64], index: 1, kind: input, shape index: {}, may-alias: {1,3}]
  %s2 = inlined_call_operand.vmem [shape: f32[8,32], index: 2, kind: input, shape index: {}]
  %s3 = inlined_call_operand.hbm [shape: f32[8,64], index: 3, kind: output, shape index: {}, may-alias: {1,3}]
  %s4 = sld [smem:[#allocation0]]
  $region22: #{tpu_custom_call.1} parent=0
    _
  %s6 = ssub.s32 1, %s4
  %s7 = scalar_select 0, %s6, %s4
  %8 = sst [smem:[#allocation3]] %s0
  $region1: #{tpu_custom_call.1} parent=0
    #allocation4 [shape = 'u8[4096]{0}', space=vmem, size = 0x1000, scoped, tag = 'input window, operand 1, single buffered']
    #allocation5 [shape = 's32[1]{0}', space=sflag, size = 0x4, scoped, tag = 'scoped memory for tpu_custom_call.1']
    #allocation6 [shape = 's32[1]{0}', space=sflag, size = 0x4, scoped, tag = 'scoped memory for tpu_custom_call.1']
    #allocation7 [shape = 'u8[4096]{0}', space=vmem, size = 0x1000, scoped, tag = 'output window, operand 0, single buffered']
    %9 = vsyncpa [#allocation5], 0
    %10 = vsyncpa [#allocation6], 0
    // Predicated region
    $region2: #{tpu_custom_call.1} parent=1 // pred_check
      _
    $region3: #{tpu_custom_call.1} parent=1 // pred_check_branch
      %12 = sbr.rel (0) target = $region5
    $region4: #{tpu_custom_call.1} parent=1 // pred_region
      %s14 = ssub.s32 128, 128
      %15 = vsyncadd [#allocation5], %s14
      %s17 = sshll.u32 [#allocation4], 4
      %s18 = int_to_ptr.vmem [resolvable:$true] %s17
      %20 = dma.hbm_to_vmem [thread:$0]  %s1, 128, %s18, [#allocation5]
    $region5: #{tpu_custom_call.1} parent=1 // pred_fallthru
      _
    // Predicated region
    $region6: #{tpu_custom_call.1} parent=1 // pred_check
      _
    $region7: #{tpu_custom_call.1} parent=1 // pred_check_branch
      %22 = sbr.rel (0) target = $region9
    $region8: #{tpu_custom_call.1} parent=1 // pred_region
      _
    $region9: #{tpu_custom_call.1} parent=1 // pred_fallthru
      _
    // Predicated region
    $region10: #{tpu_custom_call.1} parent=1 // pred_check
      _
    $region11: #{tpu_custom_call.1} parent=1 // pred_check_branch
      %24 = sbr.rel (0) target = $region13
    $region12: #{tpu_custom_call.1} parent=1 // pred_region
      %25 = dma.done [#allocation5], 128
    $region13: #{tpu_custom_call.1} parent=1 // pred_fallthru
      _
    %v26 = vld [vmem:[%s2] sm:$0xff]
    %v27 = vld [vmem:[#allocation4] sm:$0xff]
    %v28 = vadd.f32 %v27, %v26
    %vm29 = vcmask 261120
    %30 = vst.msk [vmem:[#allocation7] sm:$0xff] %vm29, %v28
    %v31 = vld [vmem:[#allocation4] sm:$0xff]
    %33 = vrot.lane.b32.xlu0 %v26, 32
    %v34 = vpop.permute.xlu0 %33
    %v36 = vadd.f32 %v31, %v34
    %vm37 = vcmask 523520
    %38 = vst.msk [vmem:[#allocation7] sm:$0xff] %vm37, %v36
    // Predicated region
    $region14: #{tpu_custom_call.1} parent=1 // pred_check
      _
    $region15: #{tpu_custom_call.1} parent=1 // pred_check_branch
      %40 = sbr.rel (0) target = $region17
    $region16: #{tpu_custom_call.1} parent=1 // pred_region
      %s42 = ssub.s32 128, 128
      %43 = vsyncadd [#allocation6], %s42
      %s45 = sshll.u32 [#allocation7], 4
      %s46 = int_to_ptr.vmem [resolvable:$true] %s45
      %48 = dma.vmem_to_hbm [thread:$0]  %s46, 128, %s3, [#allocation6]
    $region17: #{tpu_custom_call.1} parent=1 // pred_fallthru
      _
    // Predicated region
    $region18: #{tpu_custom_call.1} parent=1 // pred_check
      _
    $region19: #{tpu_custom_call.1} parent=1 // pred_check_branch
      %50 = sbr.rel (0) target = $region21
    $region20: #{tpu_custom_call.1} parent=1 // pred_region
      %51 = dma.done [#allocation6], 128
    $region21: #{tpu_custom_call.1} parent=1 // pred_fallthru
      _
    %52 = vsyncpa [#allocation5], 1
    %53 = vsyncpa [#allocation6], 1

</llo_original>
